<compile_context>
chip_gen: v7x
topology: tpu7x:2x2x1
jax: 0.10.0
libtpu: 0.0.40
codegen_flags: <defaults>
</compile_context>

<pallas_src>
import functools

import jax
import jax.numpy as jnp
from jax import lax
from jax.experimental import pallas as pl
from jax.experimental.pallas import tpu as pltpu

_EPS = 1e-8                              # matches the PyTorch reference
_VMEM_LIMIT = 40 * 1024 * 1024           # scoped-VMEM limit; safe on v7x (64 MiB/TC)
_VMEM_BUDGET = 24 * 1024 * 1024          # budget for the double-buffered input blocks
_TARGET_STEP_BYTES = 4 * 1024 * 1024     # aim for MiB-scale DMA per grid step (x + output)
_LANE_CANDIDATES = (1024, 512, 256, 128)


def _cdiv(a, b):
    return -(-a // b)


def _round_up(a, m):
    return _cdiv(a, m) * m


def _round_down(a, m):
    return (a // m) * m


def _vae_loss_kernel(thr_ref, x_ref, o_ref, mu_ref, lv_ref, loss_ref, acc_ref, *,
                     n_valid, lanes, tile_r, blocks_per_shard, batch, mask_needed):
    s = pl.program_id(0)
    d = pl.program_id(1)
    nd = pl.num_programs(1)

    @pl.when(d == 0)
    def _init():
        acc_ref[...] = jnp.zeros_like(acc_ref)

    x = x_ref[...].astype(jnp.float32)            # (tile_r, lanes), upcast in-kernel
    o = o_ref[...].astype(jnp.float32)
    # BCE rewritten as log(1-o+eps) + x*(log(o+eps) - log(1-o+eps)) -- identical to the
    # reference, one fewer VPU multiply per element.
    # TODO(synk): if callers can provide pre-sigmoid logits, fuse BCE-with-logits here
    # (drops the eps clamps and the upstream sigmoid; helps the EUP-bound v7x case).
    log_o = jnp.log(o + _EPS)
    log_1mo = jnp.log(1.0 - o + _EPS)
    bce = log_1mo + x * (log_o - log_1mo)

    if mask_needed:
        # Index-based masking of padded / out-of-bounds tail elements: whatever data the
        # edge DMA (or a clamped re-read block) delivered never contributes.
        row0 = (s * blocks_per_shard + d) * tile_r
        rows = lax.broadcasted_iota(jnp.int32, (tile_r, lanes), 0) + row0
        cols = lax.broadcasted_iota(jnp.int32, (tile_r, lanes), 1)
        bce = jnp.where(rows * lanes + cols < n_valid, bce, 0.0)

    # Pure-VPU fold into the (8, lanes) accumulator; the single cross-lane reduction
    # happens once per shard, in the finalize branch below.
    acc_ref[...] += jnp.sum(bce.reshape(tile_r // 8, 8, lanes), axis=0)

    @pl.when(d == nd - 1)
    def _finalize():
        r_partial = -jnp.sum(acc_ref[...]) * (1.0 / batch)      # mean over batch
        loss_ref[...] = jnp.broadcast_to(r_partial, loss_ref.shape)

    # KL term only depends on (mu, logvar): compute it exactly once (shard 0, last step)
    # with mu/logvar resident in VMEM (constant index_map -> no per-step re-DMA).
    @pl.when((d == nd - 1) & (s == 0))
    def _add_kl():
        mu = mu_ref[...].astype(jnp.float32)
        lv = lv_ref[...].astype(jnp.float32)
        kl_per = -0.5 * jnp.sum(1.0 + lv - mu * mu - jnp.exp(lv),
                                axis=-1, keepdims=True)         # (B, 1)
        kl_per = jnp.maximum(kl_per, thr_ref[0])                # clamp at threshold
        loss_ref[...] = loss_ref[...] + jnp.sum(kl_per) * (1.0 / batch)


def _default_num_shards():
    # The 2-way "parallel" shard axis only pays off on dual-TensorCore chips (v7x);
    # on single-TC v5e/v6e it just shrinks tiles and doubles per-step overhead.
    try:
        kind = jax.devices()[0].device_kind.lower()
    except Exception:
        return 1
    return 2 if ("v7" in kind or "tpu7" in kind) else 1


def vae_loss(x, output, mu, logvar, kl_loss_threshold=0.0, num_shards=None):
    """Pallas implementation of VAELoss.forward with use_focal_loss=False."""
    # TODO(synk): the use_focal_loss=True branch calls focal_loss(), which is not defined
    # in the reference source, so only the BCE reconstruction path is implemented.
    B = x.shape[0]
    Z = mu.shape[1]
    n_valid = int(x.size)                     # B * C * H * W elements

    if num_shards is None:
        num_shards = _default_num_shards()

    # ---- dense, sublane-friendly 2-D layout of the flattened element stream ----------
    lanes = None
    for cand in _LANE_CANDIDATES:
        if n_valid % cand == 0 and n_valid // cand >= 8:
            lanes = cand
            break
    x_flat = x.reshape(-1)
    o_flat = output.reshape(-1)
    if lanes is None:
        # Rare awkward-shape fallback: pad the flat stream up to a (>=8, 128) rectangle.
        # Padded elements are masked in-kernel by index, so the pad value is irrelevant.
        lanes = 128
        padded = max(8, _cdiv(n_valid, lanes)) * lanes
        x_flat = jnp.pad(x_flat, (0, padded - n_valid))
        o_flat = jnp.pad(o_flat, (0, padded - n_valid))
    rows = x_flat.size // lanes
    x2d = x_flat.reshape(rows, lanes)
    o2d = o_flat.reshape(rows, lanes)

    if rows < num_shards * 16:                # not enough data to split across cores
        num_shards = 1

    # ---- block sizing: MiB-scale DMA per step, sized by the real wire dtypes ---------
    bytes_per_row = lanes * (x2d.dtype.itemsize + o2d.dtype.itemsize)
    tile_r = max(8, _TARGET_STEP_BYTES // bytes_per_row)
    vmem_rows = (_VMEM_BUDGET - 8 * lanes * 4) // (2 * bytes_per_row)   # 2 pipeline buffers
    tile_r = min(tile_r, max(8, vmem_rows))
    tile_r = min(tile_r, max(8, _round_up(_cdiv(rows, num_shards), 8)))
    tile_r = max(8, _round_down(min(tile_r, rows), 8))   # block must fit inside the array

    blocks_total = _cdiv(rows, tile_r)
    blocks_per_shard = max(1, _cdiv(blocks_total, num_shards))
    last_block = blocks_total - 1
    # Masking can be skipped (statically) when the grid tiles the array exactly.
    mask_needed = not (rows * lanes == n_valid
                       and rows % tile_r == 0
                       and num_shards * blocks_per_shard == blocks_total)

    def xo_map(s, d):
        # Clamp so over-provisioned shard steps re-read the last valid block; their
        # contribution is zeroed by the in-kernel index mask.
        return (jnp.minimum(s * blocks_per_shard + d, last_block), 0)

    kernel = functools.partial(
        _vae_loss_kernel,
        n_valid=n_valid, lanes=lanes, tile_r=tile_r,
        blocks_per_shard=blocks_per_shard, batch=B, mask_needed=mask_needed)

    cost = pl.CostEstimate(
        flops=6 * n_valid + 6 * B * Z,
        transcendentals=2 * n_valid + B * Z,
        bytes_accessed=n_valid * (x2d.dtype.itemsize + o2d.dtype.itemsize)
        + B * Z * (mu.dtype.itemsize + logvar.dtype.itemsize))

    thr = jnp.asarray([kl_loss_threshold], dtype=jnp.float32)

    partials = pl.pallas_call(
        kernel,
        out_shape=jax.ShapeDtypeStruct((num_shards, 8, 128), jnp.float32),
        grid_spec=pltpu.PrefetchScalarGridSpec(
            num_scalar_prefetch=0,
            grid=(num_shards, blocks_per_shard),
            in_specs=[
                pl.BlockSpec(memory_space=pltpu.MemorySpace.SMEM),   # kl threshold scalar
                pl.BlockSpec((tile_r, lanes), xo_map),               # x       (pipelined)
                pl.BlockSpec((tile_r, lanes), xo_map),               # output  (pipelined)
                pl.BlockSpec((B, Z), lambda s, d: (0, 0)),           # mu      (resident)
                pl.BlockSpec((B, Z), lambda s, d: (0, 0)),           # logvar  (resident)
            ],
            out_specs=pl.BlockSpec((1, 8, 128), lambda s, d: (s, 0, 0)),
            scratch_shapes=[pltpu.VMEM((8, lanes), jnp.float32)],    # BCE accumulator
        ),
        compiler_params=pltpu.CompilerParams(
            dimension_semantics=("parallel", "arbitrary"),
            vmem_limit_bytes=_VMEM_LIMIT,
        ),
        cost_estimate=cost,
    )(thr, x2d, o2d, mu, logvar)

    # Trivial cross-shard reduction (num_shards scalars) in the wrapper so the shard
    # axis can be megacore-parallel on v7x.
    return jnp.sum(partials[:, 0, 0])


def _reference(x, output, mu, logvar, kl_loss_threshold=0.0):
    eps = 1e-8
    r = -jnp.sum(x * jnp.log(output + eps) + (1 - x) * jnp.log(1 - output + eps),
                 axis=(1, 2, 3))
    r = jnp.mean(r)
    kl = -0.5 * jnp.sum(1 + logvar - jnp.square(mu) - jnp.exp(logvar), axis=1)
    kl = jnp.mean(jnp.maximum(kl, kl_loss_threshold))
    return kl + r


if __name__ == "__main__":
    key = jax.random.PRNGKey(0)
    k1, k2, k3, k4 = jax.random.split(key, 4)

    B, C, H, W, Z = 2, 4, 16, 16, 32
    # x: targets in [0,1]; output: decoder probabilities in (0,1)
    x = jax.random.uniform(k1, (B, C, H, W), dtype=jnp.float32)
    output = jax.nn.sigmoid(jax.random.normal(k2, (B, C, H, W), dtype=jnp.float32))
    mu = jax.random.normal(k3, (B, Z), dtype=jnp.float32)
    logvar = 0.1 * jax.random.normal(k4, (B, Z), dtype=jnp.float32)

    loss = vae_loss(x, output, mu, logvar, kl_loss_threshold=0.0)
    loss = jax.block_until_ready(loss)

    ref = _reference(x, output, mu, logvar, 0.0)
    assert jnp.allclose(loss, ref, rtol=1e-4, atol=1e-4), (loss, ref)
    print("KERNEL_OK")
</pallas_src>

<mosaic_0001>
module attributes {stable_mosaic.version = 11 : i64} {
  func.func @_vae_loss_kernel(%arg0: i32, %arg1: i32, %arg2: memref<1xf32, #tpu.memory_space<smem>>, %arg3: memref<8x256xf32, #tpu.memory_space<vmem>>, %arg4: memref<8x256xf32, #tpu.memory_space<vmem>>, %arg5: memref<2x32xf32, #tpu.memory_space<vmem>>, %arg6: memref<2x32xf32, #tpu.memory_space<vmem>>, %arg7: memref<1x8x128xf32, #tpu.memory_space<vmem>>, %arg8: memref<8x256xf32, #tpu.memory_space<vmem>>) attributes {dimension_semantics = [#tpu.dimension_semantics<parallel>, #tpu.dimension_semantics<arbitrary>], iteration_bounds = array<i64: 1, 1>, scalar_prefetch = 0 : i64, scratch_operands = 1 : i64, tpu.core_type = #tpu.core_type<tc>, window_params = [{transform_indices = @transform_0, window_bounds = array<i64: 1>}, {transform_indices = @transform_1, window_bounds = array<i64: 8, 256>}, {transform_indices = @transform_2, window_bounds = array<i64: 8, 256>}, {pipeline_mode = #tpu.pipeline_mode<synchronous>, transform_indices = @transform_3, window_bounds = array<i64: 2, 32>}, {pipeline_mode = #tpu.pipeline_mode<synchronous>, transform_indices = @transform_4, window_bounds = array<i64: 2, 32>}, {transform_indices = @transform_5, window_bounds = array<i64: 1, 8, 128>}]} {
    %c0_i32 = arith.constant 0 : i32
    %0 = arith.cmpi eq, %arg1, %c0_i32 : i32
    %1 = arith.extui %0 : i1 to i32
    %c0_i32_0 = arith.constant 0 : i32
    %2 = arith.cmpi ne, %1, %c0_i32_0 : i32
    scf.if %2 {
      %cst_16 = arith.constant 0.000000e+00 : f32
      %29 = vector.broadcast %cst_16 : f32 to vector<8x256xf32>
      %c0_17 = arith.constant 0 : index
      %c0_18 = arith.constant 0 : index
      %30 = vector.load %arg8[%c0_17, %c0_18] : memref<8x256xf32, #tpu.memory_space<vmem>>, vector<8x256xf32>
      tpu.vector_store %arg8[%c0_17, %c0_18], %29 {strides = array<i32>} : memref<8x256xf32, #tpu.memory_space<vmem>>, vector<8x256xf32>,
    } else {
    }
    %c0 = arith.constant 0 : index
    %c0_1 = arith.constant 0 : index
    %3 = vector.load %arg3[%c0, %c0_1] : memref<8x256xf32, #tpu.memory_space<vmem>>, vector<8x256xf32>
    %c0_2 = arith.constant 0 : index
    %c0_3 = arith.constant 0 : index
    %4 = vector.load %arg4[%c0_2, %c0_3] : memref<8x256xf32, #tpu.memory_space<vmem>>, vector<8x256xf32>
    %cst = arith.constant 9.99999993E-9 : f32
    %5 = vector.broadcast %cst : f32 to vector<8x256xf32>
    %6 = arith.addf %4, %5 : vector<8x256xf32>
    %7 = math.log %6 : vector<8x256xf32>
    %cst_4 = arith.constant 1.000000e+00 : f32
    %8 = vector.broadcast %cst_4 : f32 to vector<8x256xf32>
    %9 = arith.subf %8, %4 : vector<8x256xf32>
    %cst_5 = arith.constant 9.99999993E-9 : f32
    %10 = vector.broadcast %cst_5 : f32 to vector<8x256xf32>
    %11 = arith.addf %9, %10 : vector<8x256xf32>
    %12 = math.log %11 : vector<8x256xf32>
    %13 = arith.subf %7, %12 : vector<8x256xf32>
    %14 = arith.mulf %3, %13 : vector<8x256xf32>
    %15 = arith.addf %12, %14 : vector<8x256xf32>
    %c0_6 = arith.constant 0 : index
    %c0_7 = arith.constant 0 : index
    %16 = vector.load %arg8[%c0_6, %c0_7] : memref<8x256xf32, #tpu.memory_space<vmem>>, vector<8x256xf32>
    %17 = vector.shape_cast %15 : vector<8x256xf32> to vector<1x8x256xf32>
    %cst_8 = arith.constant dense<0.000000e+00> : vector<8x256xf32>
    %18 = vector.multi_reduction <add>, %17, %cst_8 [0] : vector<1x8x256xf32> to vector<8x256xf32>
    %19 = arith.addf %16, %18 : vector<8x256xf32>
    %c0_9 = arith.constant 0 : index
    %c0_10 = arith.constant 0 : index
    %20 = vector.load %arg8[%c0_9, %c0_10] : memref<8x256xf32, #tpu.memory_space<vmem>>, vector<8x256xf32>
    tpu.vector_store %arg8[%c0_9, %c0_10], %19 {strides = array<i32>} : memref<8x256xf32, #tpu.memory_space<vmem>>, vector<8x256xf32>,
    %c0_i32_11 = arith.constant 0 : i32
    %21 = arith.cmpi eq, %arg1, %c0_i32_11 : i32
    %22 = arith.extui %21 : i1 to i32
    %c0_i32_12 = arith.constant 0 : i32
    %23 = arith.cmpi ne, %22, %c0_i32_12 : i32
    scf.if %23 {
      %c0_16 = arith.constant 0 : index
      %c0_17 = arith.constant 0 : index
      %29 = vector.load %arg8[%c0_16, %c0_17] : memref<8x256xf32, #tpu.memory_space<vmem>>, vector<8x256xf32>
      %30 = vector.shape_cast %29 : vector<8x256xf32> to vector<1x8x256xf32>
      %cst_18 = arith.constant dense<0.000000e+00> : vector<1xf32>
      %31 = vector.multi_reduction <add>, %30, %cst_18 [1, 2] : vector<1x8x256xf32> to vector<1xf32>
      %32 = vector.shape_cast %31 : vector<1xf32> to vector<1x1x1xf32>
      %33 = vector.extract %32[0, 0, 0] : f32 from vector<1x1x1xf32>
      %cst_19 = arith.constant 0.000000e+00 : f32
      %34 = arith.subf %cst_19, %33 : f32
      %cst_20 = arith.constant 5.000000e-01 : f32
      %35 = arith.mulf %34, %cst_20 : f32
      %36 = vector.broadcast %35 : f32 to vector<1x8x128xf32>
      %c0_21 = arith.constant 0 : index
      %c0_22 = arith.constant 0 : index
      %c0_23 = arith.constant 0 : index
      %37 = vector.load %arg7[%c0_21, %c0_22, %c0_23] : memref<1x8x128xf32, #tpu.memory_space<vmem>>, vector<1x8x128xf32>
      tpu.vector_store %arg7[%c0_21, %c0_22, %c0_23], %36 {strides = array<i32>} : memref<1x8x128xf32, #tpu.memory_space<vmem>>, vector<1x8x128xf32>,
    } else {
    }
    %c0_i32_13 = arith.constant 0 : i32
    %24 = arith.cmpi eq, %arg1, %c0_i32_13 : i32
    %c0_i32_14 = arith.constant 0 : i32
    %25 = arith.cmpi eq, %arg0, %c0_i32_14 : i32
    %26 = arith.andi %24, %25 : i1
    %27 = arith.extui %26 : i1 to i32
    %c0_i32_15 = arith.constant 0 : i32
    %28 = arith.cmpi ne, %27, %c0_i32_15 : i32
    scf.if %28 {
      %c0_16 = arith.constant 0 : index
      %c0_17 = arith.constant 0 : index
      %29 = vector.load %arg5[%c0_16, %c0_17] : memref<2x32xf32, #tpu.memory_space<vmem>>, vector<2x32xf32>
      %c0_18 = arith.constant 0 : index
      %c0_19 = arith.constant 0 : index
      %30 = vector.load %arg6[%c0_18, %c0_19] : memref<2x32xf32, #tpu.memory_space<vmem>>, vector<2x32xf32>
      %cst_20 = arith.constant 1.000000e+00 : f32
      %31 = vector.broadcast %cst_20 : f32 to vector<2x32xf32>
      %32 = arith.addf %31, %30 : vector<2x32xf32>
      %33 = arith.mulf %29, %29 : vector<2x32xf32>
      %34 = arith.subf %32, %33 : vector<2x32xf32>
      %35 = math.exp %30 : vector<2x32xf32>
      %36 = arith.subf %34, %35 : vector<2x32xf32>
      %cst_21 = arith.constant dense<0.000000e+00> : vector<2xf32>
      %37 = vector.multi_reduction <add>, %36, %cst_21 [1] : vector<2x32xf32> to vector<2xf32>
      %38 = vector.shape_cast %37 : vector<2xf32> to vector<2x1xf32>
      %cst_22 = arith.constant -5.000000e-01 : f32
      %39 = vector.broadcast %cst_22 : f32 to vector<2x1xf32>
      %40 = arith.mulf %39, %38 : vector<2x1xf32>
      %c0_23 = arith.constant 0 : index
      %41 = memref.load %arg2[%c0_23] : memref<1xf32, #tpu.memory_space<smem>>
      %42 = vector.broadcast %41 : f32 to vector<2x1xf32>
      %43 = arith.maximumf %40, %42 : vector<2x1xf32>
      %c0_24 = arith.constant 0 : index
      %c0_25 = arith.constant 0 : index
      %c0_26 = arith.constant 0 : index
      %44 = vector.load %arg7[%c0_24, %c0_25, %c0_26] : memref<1x8x128xf32, #tpu.memory_space<vmem>>, vector<1x8x128xf32>
      %45 = vector.shape_cast %43 : vector<2x1xf32> to vector<1x2x1xf32>
      %cst_27 = arith.constant dense<0.000000e+00> : vector<1xf32>
      %46 = vector.multi_reduction <add>, %45, %cst_27 [1, 2] : vector<1x2x1xf32> to vector<1xf32>
      %47 = vector.shape_cast %46 : vector<1xf32> to vector<1x1x1xf32>
      %48 = vector.extract %47[0, 0, 0] : f32 from vector<1x1x1xf32>
      %cst_28 = arith.constant 5.000000e-01 : f32
      %49 = arith.mulf %48, %cst_28 : f32
      %50 = vector.broadcast %49 : f32 to vector<1x8x128xf32>
      %51 = arith.addf %44, %50 : vector<1x8x128xf32>
      %c0_29 = arith.constant 0 : index
      %c0_30 = arith.constant 0 : index
      %c0_31 = arith.constant 0 : index
      %52 = vector.load %arg7[%c0_29, %c0_30, %c0_31] : memref<1x8x128xf32, #tpu.memory_space<vmem>>, vector<1x8x128xf32>
      tpu.vector_store %arg7[%c0_29, %c0_30, %c0_31], %51 {strides = array<i32>} : memref<1x8x128xf32, #tpu.memory_space<vmem>>, vector<1x8x128xf32>,
    } else {
    }
    return
  }
  func.func @transform_0(%arg0: i32, %arg1: i32) -> i32 {
    %c0_i32 = arith.constant 0 : i32
    %c0_i32_0 = arith.constant 0 : i32
    return %c0_i32 : i32
  }
  func.func @transform_1(%arg0: i32, %arg1: i32) -> (i32, i32) {
    %c1_i32 = arith.constant 1 : i32
    %0 = arith.muli %arg0, %c1_i32 : i32
    %1 = arith.addi %0, %arg1 : i32
    %c0_i32 = arith.constant 0 : i32
    %2 = arith.minsi %1, %c0_i32 : i32
    %c0_i32_0 = arith.constant 0 : i32
    %c0_i32_1 = arith.constant 0 : i32
    return %2, %c0_i32_0 : i32, i32
  }
  func.func @transform_2(%arg0: i32, %arg1: i32) -> (i32, i32) {
    %c1_i32 = arith.constant 1 : i32
    %0 = arith.muli %arg0, %c1_i32 : i32
    %1 = arith.addi %0, %arg1 : i32
    %c0_i32 = arith.constant 0 : i32
    %2 = arith.minsi %1, %c0_i32 : i32
    %c0_i32_0 = arith.constant 0 : i32
    %c0_i32_1 = arith.constant 0 : i32
    return %2, %c0_i32_0 : i32, i32
  }
  func.func @transform_3(%arg0: i32, %arg1: i32) -> (i32, i32) {
    %c0_i32 = arith.constant 0 : i32
    %c0_i32_0 = arith.constant 0 : i32
    %c0_i32_1 = arith.constant 0 : i32
    return %c0_i32, %c0_i32_0 : i32, i32
  }
  func.func @transform_4(%arg0: i32, %arg1: i32) -> (i32, i32) {
    %c0_i32 = arith.constant 0 : i32
    %c0_i32_0 = arith.constant 0 : i32
    %c0_i32_1 = arith.constant 0 : i32
    return %c0_i32, %c0_i32_0 : i32, i32
  }
  func.func @transform_5(%arg0: i32, %arg1: i32) -> (i32, i32, i32) {
    %c0_i32 = arith.constant 0 : i32
    %c0_i32_0 = arith.constant 0 : i32
    %c0_i32_1 = arith.constant 0 : i32
    return %arg0, %c0_i32, %c0_i32_0 : i32, i32, i32
  }
}

</mosaic_0001>

<llo_original>
// kernel: tpu_custom_call.1
$region0: #{tpu_custom_call.1}
  #allocation0 [shape = 'u32[]', space=smem, size = 0x4, offset = 0x4, fixed_abs, tag = 'smem constant byte address 0x4 - core index']
  #allocation1 [shape = 'u32[144,128]{1,0:T(1,128)}', space=vmem, size = 0x12000, scoped, tag = 'internal scratch']
  #allocation2 [shape = 'f32[8,256]{1,0:T(8,128)}', space=vmem, size = 0x2000, scoped, tag = 'scratch operand']
  #allocation3 [shape = 'f32[1]{0:T(128)S(6)}', space=smem, size = 0x200, scoped, tag = 'scoped memory for tpu_custom_call.1']
  %s0 = inlined_call_operand.<no memory space> [shape: f32[1], index: 0, kind: input, shape index: {}]
  %s1 = inlined_call_operand.hbm [shape: f32[8,256], index: 1, kind: input, shape index: {}]
  %s2 = inlined_call_operand.hbm [shape: f32[8,256], index: 2, kind: input, shape index: {}]
  %s3 = inlined_call_operand.vmem [shape: f32[2,32], index: 3, kind: input, shape index: {}]
  %s4 = inlined_call_operand.vmem [shape: f32[2,32], index: 4, kind: input, shape index: {}]
  %s5 = inlined_call_operand.hbm [shape: f32[1,8,128], index: 5, kind: output, shape index: {}]
  %s6 = sld [smem:[#allocation0]]
  $region50: #{tpu_custom_call.1} parent=0
    _
  %s8 = ssub.s32 1, %s6
  %s9 = scalar_select 0, %s8, %s6
  %10 = sst [smem:[#allocation3]] %s0
  $region1: #{tpu_custom_call.1} parent=0
    #allocation4 [shape = 'u8[8192]{0}', space=vmem, size = 0x2000, scoped, tag = 'input window, operand 1, single buffered']
    #allocation5 [shape = 's32[1]{0}', space=sflag, size = 0x4, scoped, tag = 'scoped memory for tpu_custom_call.1']
    #allocation6 [shape = 's32[1]{0}', space=sflag, size = 0x4, scoped, tag = 'scoped memory for tpu_custom_call.1']
    #allocation7 [shape = 'u8[8192]{0}', space=vmem, size = 0x2000, scoped, tag = 'input window, operand 2, single buffered']
    #allocation8 [shape = 's32[1]{0}', space=sflag, size = 0x4, scoped, tag = 'scoped memory for tpu_custom_call.1']
    #allocation9 [shape = 'u8[4096]{0}', space=vmem, size = 0x1000, scoped, tag = 'output window, operand 0, single buffered']
    %11 = vsyncpa [#allocation5], 0
    %12 = vsyncpa [#allocation8], 0
    %13 = vsyncpa [#allocation6], 0
    // Predicated region
    $region2: #{tpu_custom_call.1} parent=1 // pred_check
      _
    $region3: #{tpu_custom_call.1} parent=1 // pred_check_branch
      %15 = sbr.rel (0) target = $region5
    $region4: #{tpu_custom_call.1} parent=1 // pred_region
      _
    $region5: #{tpu_custom_call.1} parent=1 // pred_fallthru
      _
    // Predicated region
    $region6: #{tpu_custom_call.1} parent=1 // pred_check
      _
    $region7: #{tpu_custom_call.1} parent=1 // pred_check_branch
      %17 = sbr.rel (0) target = $region9
    $region8: #{tpu_custom_call.1} parent=1 // pred_region
      %s18 = sadd.s32 0, 0
      %p19 = scmp.lt.s32.totalorder %s18, 0
      %s20 = scalar_select %p19, %s18, 0
      %s22 = ssub.s32 256, 256
      %23 = vsyncadd [#allocation5], %s22
      %s24 = smul.addr %s20, 2
      %s25 = smul.addr %s24, 128
      %s26 = scalar_lea.hbm %s1, %s25
      %s28 = sshll.u32 [#allocation4], 4
      %s29 = int_to_ptr.vmem [resolvable:$true] %s28
      %31 = dma.hbm_to_vmem [thread:$0]  %s26, 256, %s29, [#allocation5]
    $region9: #{tpu_custom_call.1} parent=1 // pred_fallthru
      _
    // Predicated region
    $region10: #{tpu_custom_call.1} parent=1 // pred_check
      _
    $region11: #{tpu_custom_call.1} parent=1 // pred_check_branch
      %33 = sbr.rel (0) target = $region13
    $region12: #{tpu_custom_call.1} parent=1 // pred_region
      %s34 = sadd.s32 0, 0
      %p35 = scmp.lt.s32.totalorder %s34, 0
      %s36 = scalar_select %p35, %s34, 0
      %s38 = ssub.s32 256, 256
      %39 = vsyncadd [#allocation8], %s38
      %s40 = smul.addr %s36, 2
      %s41 = smul.addr %s40, 128
      %s42 = scalar_lea.hbm %s2, %s41
      %s44 = sshll.u32 [#allocation7], 4
      %s45 = int_to_ptr.vmem [resolvable:$true] %s44
      %47 = dma.hbm_to_vmem [thread:$0]  %s42, 256, %s45, [#allocation8]
    $region13: #{tpu_custom_call.1} parent=1 // pred_fallthru
      _
    // Predicated region
    $region14: #{tpu_custom_call.1} parent=1 // pred_check
      _
    $region15: #{tpu_custom_call.1} parent=1 // pred_check_branch
      %49 = sbr.rel (0) target = $region17
    $region16: #{tpu_custom_call.1} parent=1 // pred_region
      _
    $region17: #{tpu_custom_call.1} parent=1 // pred_fallthru
      _
    // Predicated region
    $region18: #{tpu_custom_call.1} parent=1 // pred_check
      _
    $region19: #{tpu_custom_call.1} parent=1 // pred_check_branch
      %51 = sbr.rel (0) target = $region21
    $region20: #{tpu_custom_call.1} parent=1 // pred_region
      _
    $region21: #{tpu_custom_call.1} parent=1 // pred_fallthru
      _
    // Predicated region
    $region22: #{tpu_custom_call.1} parent=1 // pred_check
      _
    $region23: #{tpu_custom_call.1} parent=1 // pred_check_branch
      %53 = sbr.rel (0) target = $region25
    $region24: #{tpu_custom_call.1} parent=1 // pred_region
      %54 = dma.done [#allocation5], 256
    $region25: #{tpu_custom_call.1} parent=1 // pred_fallthru
      _
    // Predicated region
    $region26: #{tpu_custom_call.1} parent=1 // pred_check
      _
    $region27: #{tpu_custom_call.1} parent=1 // pred_check_branch
      %56 = sbr.rel (0) target = $region29
    $region28: #{tpu_custom_call.1} parent=1 // pred_region
      %57 = dma.done [#allocation8], 256
    $region29: #{tpu_custom_call.1} parent=1 // pred_fallthru
      _
    %s58 = sadd.s32 0, 0
    %p59 = scmp.lt.s32.totalorder %s58, 0
    %s60 = scalar_select %p59, %s58, 0
    %s61 = sadd.s32 0, 0
    %p62 = scmp.lt.s32.totalorder %s61, 0
    %s63 = scalar_select %p62, %s61, 0
    %p64 = scmp.eq.s32.totalorder 0, 0
    // Predicated region
    $region30: #{tpu_custom_call.1} parent=1 // pred_check
      %p65 = pneg %p64
    $region31: #{tpu_custom_call.1} parent=1 // pred_check_branch
      %67 = sbr.rel (%p65) target = $region33
    $region32: #{tpu_custom_call.1} parent=1 // pred_region
      %68 = vst [vmem:[#allocation2] sm:$0xff] 0.0
      %69 = vst [vmem:[#allocation2 + $0x8] sm:$0xff] 0.0
    $region33: #{tpu_custom_call.1} parent=1 // pred_fallthru
      _
    %v70 = vld [vmem:[#allocation4] sm:$0xff]
    %v71 = vld [vmem:[#allocation4 + $0x8] sm:$0xff]
    %v72 = vld [vmem:[#allocation7] sm:$0xff]
    %v73 = vld [vmem:[#allocation7 + $0x8] sm:$0xff]
    %v74 = vadd.f32 %v72, 1e-08
    %v75 = vadd.f32 %v73, 1e-08
    %v76 = vlog2.pop %v74
    %v77 = vmul.f32 %v76, 0.6931472
    %v78 = vlog2.pop %v75
    %v79 = vmul.f32 %v78, 0.6931472
    %v80 = vsub.f32 1.0, %v72
    %v81 = vsub.f32 1.0, %v73
    %v82 = vadd.f32 %v80, 1e-08
    %v83 = vadd.f32 %v81, 1e-08
    %v84 = vlog2.pop %v82
    %v85 = vmul.f32 %v84, 0.6931472
    %v86 = vlog2.pop %v83
    %v87 = vmul.f32 %v86, 0.6931472
    %v88 = vsub.f32 %v77, %v85
    %v89 = vsub.f32 %v79, %v87
    %v90 = vmul.f32 %v70, %v88
    %v91 = vmul.f32 %v71, %v89
    %v92 = vadd.f32 %v85, %v90
    %v93 = vadd.f32 %v87, %v91
    %v94 = vld [vmem:[#allocation2] sm:$0xff]
    %v95 = vld [vmem:[#allocation2 + $0x8] sm:$0xff]
    %v96 = vadd.f32 %v92, 0.0
    %v97 = vadd.f32 %v93, 0.0
    %v98 = vadd.f32 %v94, %v96
    %v99 = vadd.f32 %v95, %v97
    %100 = vst [vmem:[#allocation2] sm:$0xff] %v98
    %101 = vst [vmem:[#allocation2 + $0x8] sm:$0xff] %v99
    // Predicated region
    $region34: #{tpu_custom_call.1} parent=1 // pred_check
      %p102 = pneg %p64
    $region35: #{tpu_custom_call.1} parent=1 // pred_check_branch
      %104 = sbr.rel (%p102) target = $region37
    $region36: #{tpu_custom_call.1} parent=1 // pred_region
      %v105 = vld [vmem:[#allocation2] sm:$0xff]
      %v106 = vld [vmem:[#allocation2 + $0x8] sm:$0xff]
      %v107 = vadd.f32 %v105, %v106
      %108 = vadd.xlane.f32.xlu0 %v107
      %v109 = vpop.xlane.xlu0 %108
      %v110 = vrot.slane %v109, 4
      %v111 = vadd.f32 %v109, %v110
      %v112 = vrot.slane %v111, 2
      %v113 = vadd.f32 %v111, %v112
      %v114 = vrot.slane %v113, 1
      %v115 = vadd.f32 %v113, %v114
      %s116 = vtos %v115
      %s117 = ssub.f32 0.0, %s116
      %s118 = smul.f32 %s117, 0.5
      %v119 = vstv %s118
      %120 = vst [vmem:[#allocation9] sm:$0xff] %v119
    $region37: #{tpu_custom_call.1} parent=1 // pred_fallthru
      _
    %p121 = scmp.eq.s32.totalorder 0, 0
    %p122 = pnand %p64, %p121
    %p123 = pneg %p122
    // Predicated region
    $region38: #{tpu_custom_call.1} parent=1 // pred_check
      _
    $region39: #{tpu_custom_call.1} parent=1 // pred_check_branch
      %125 = sbr.rel (%p122) target = $region41
    $region40: #{tpu_custom_call.1} parent=1 // pred_region
      %v126 = vld [vmem:[%s3] sm:$0x3]
      %v127 = vld [vmem:[%s4] sm:$0x3]
      %v128 = vadd.f32 %v127, 1.0
      %v129 = vmul.f32 %v126, %v126
      %v130 = vsub.f32 %v128, %v129
      %v131 = vmul.f32 %v127, 1.442695
      %v132 = vpow.pop %v131
      %v133 = vsub.f32 %v130, %v132
      %vm134 = vcmask 254976
      %v135 = vsel %vm134, %v133, 0.0
      %136 = vadd.xlane.f32.xlu0 %v135
      %v137 = vpop.xlane.xlu0 %136
      %v138 = vmul.f32 %v137, -0.5
      %s139 = sld [smem:[#allocation3]]
      %v140 = vstv %s139
      %v141 = vmax.f32 %v138, %v140
      %v142 = vld [vmem:[#allocation9] sm:$0xff]
      %vm143 = vcmask 1024
      %v144 = vsel %vm143, %v141, 0.0
      %145 = vadd.xlane.f32.xlu0 %v144
      %v146 = vpop.xlane.xlu0 %145
      %v147 = vrot.slane %v146, 4
      %v148 = vadd.f32 %v146, %v147
      %v149 = vrot.slane %v148, 2
      %v150 = vadd.f32 %v148, %v149
      %v151 = vrot.slane %v150, 1
      %v152 = vadd.f32 %v150, %v151
      %s153 = vtos %v152
      %s154 = smul.f32 %s153, 0.5
      %v155 = vstv %s154
      %v156 = vadd.f32 %v142, %v155
      %157 = vst [vmem:[#allocation9] sm:$0xff] %v156
    $region41: #{tpu_custom_call.1} parent=1 // pred_fallthru
      _
    // Predicated region
    $region42: #{tpu_custom_call.1} parent=1 // pred_check
      _
    $region43: #{tpu_custom_call.1} parent=1 // pred_check_branch
      %159 = sbr.rel (0) target = $region45
    $region44: #{tpu_custom_call.1} parent=1 // pred_region
      %s161 = ssub.s32 128, 128
      %162 = vsyncadd [#allocation6], %s161
      %s164 = sshll.u32 [#allocation9], 4
      %s165 = int_to_ptr.vmem [resolvable:$true] %s164
      %167 = dma.vmem_to_hbm [thread:$0]  %s165, 128, %s5, [#allocation6]
    $region45: #{tpu_custom_call.1} parent=1 // pred_fallthru
      _
    // Predicated region
    $region46: #{tpu_custom_call.1} parent=1 // pred_check
      _
    $region47: #{tpu_custom_call.1} parent=1 // pred_check_branch
      %169 = sbr.rel (0) target = $region49
    $region48: #{tpu_custom_call.1} parent=1 // pred_region
      %170 = dma.done [#allocation6], 128
    $region49: #{tpu_custom_call.1} parent=1 // pred_fallthru
      _
    %171 = vsyncpa [#allocation5], 1
    %172 = vsyncpa [#allocation8], 1
    %173 = vsyncpa [#allocation6], 1

</llo_original>
